<compile_context>
chip_gen: v7x
topology: tpu7x:2x2x1
jax: 0.10.0
libtpu: 0.0.40
codegen_flags: <defaults>
</compile_context>

<pallas_src>
import jax
import jax.numpy as jnp
from jax.experimental import pallas as pl
from jax.experimental.pallas import tpu as pltpu

LANES = 128
MAX_BLOCK_ROWS = 1024   # 1024 x 128 f32 = 512 KiB per input tile
SPLIT_MIN_ROWS = 1024   # 2-way split once each TensorCore gets >= 512 rows of work


def _round_up(v, m):
    return ((v + m - 1) // m) * m


def _cdiv(a, b):
    return -(-a // b)


def _balanced_ce_kernel(x_ref, t_ref, pos_ref, wneg_ref, wpos_ref):
    """Fused pass: accumulate sum(t), sum(t*softplus(-x)), sum((1-t)*softplus(x))."""
    x = x_ref[...].astype(jnp.float32)
    t = t_ref[...].astype(jnp.float32)

    # Numerically stable BCE-with-logits pieces (same form as PyTorch):
    #   softplus(-x) = -log(sigmoid(x));  softplus(x) = softplus(-x) + x (exact in FP)
    l = jnp.log1p(jnp.exp(-jnp.abs(x)))
    sp_neg = jnp.maximum(-x, 0.0) + l
    sp_pos = sp_neg + x

    pos_v = t
    wneg_v = t * sp_neg
    wpos_v = (1.0 - t) * sp_pos

    step = pl.program_id(1)

    @pl.when(step == 0)
    def _():  # first block of this split: write directly (no zero-init pass)
        pos_ref[0] = pos_v
        wneg_ref[0] = wneg_v
        wpos_ref[0] = wpos_v

    @pl.when(step != 0)
    def _():  # subsequent blocks: full-tile vector accumulation (pure VPU adds)
        pos_ref[0] += pos_v
        wneg_ref[0] += wneg_v
        wpos_ref[0] += wpos_v


@jax.jit
def balanced_ce(logits, target):
    if not jnp.issubdtype(logits.dtype, jnp.floating):
        logits = logits.astype(jnp.float32)
    if not jnp.issubdtype(target.dtype, jnp.floating):
        target = target.astype(jnp.float32)

    n = logits.size
    rows = _cdiv(n, LANES)

    # --- static tiling / split selection (all trace-time Python ints) -----------
    num_splits = 2 if rows >= SPLIT_MIN_ROWS else 1
    blocks_per_split = _cdiv(rows, num_splits * MAX_BLOCK_ROWS)
    block_rows = _round_up(_cdiv(rows, num_splits * blocks_per_split), 8)
    padded_rows = num_splits * blocks_per_split * block_rows
    padded_n = padded_rows * LANES

    # Padded logits use a huge finite negative (NOT -inf): softplus(x_pad) == 0 and
    # t_pad == 0, so padded elements contribute exactly 0 to every partial sum.
    x_pad = float(jnp.finfo(logits.dtype).min)

    def prep(flat, pad_value):
        if padded_n != flat.shape[0]:  # static; skip the pad copy when tile-aligned
            flat = jnp.pad(flat, (0, padded_n - flat.shape[0]),
                           constant_values=pad_value)
        return flat.reshape(padded_rows, LANES)

    x2d = prep(logits.reshape(-1), x_pad)
    t2d = prep(target.reshape(-1), 0.0)

    in_spec = pl.BlockSpec(
        (block_rows, LANES), lambda s, i: (s * blocks_per_split + i, 0)
    )
    acc_shape = (num_splits, block_rows, LANES)
    acc_spec = pl.BlockSpec((1, block_rows, LANES), lambda s, i: (s, 0, 0))

    pos_p, wneg_p, wpos_p = pl.pallas_call(
        _balanced_ce_kernel,
        out_shape=(jax.ShapeDtypeStruct(acc_shape, jnp.float32),) * 3,
        grid=(num_splits, blocks_per_split),
        in_specs=[in_spec, in_spec],
        out_specs=(acc_spec, acc_spec, acc_spec),
        compiler_params=pltpu.CompilerParams(
            dimension_semantics=("parallel", "arbitrary")
        ),
    )(x2d, t2d)

    nf = jnp.float32(n)
    count_pos = jnp.sum(pos_p)
    count_neg = nf - count_pos  # == sum(1 - t) over the true (unpadded) elements

    # target.sum() > 0 branch -> pos_weight = beta/(1-beta) = count_neg/count_pos;
    # otherwise plain BCE (pos_weight = 1).  Both branches are the same weighted BCE,
    # so the PyTorch data-dependent `if` collapses to a scalar jnp.where.
    pos_weight = jnp.where(
        count_pos > 0.0, count_neg / jnp.maximum(count_pos, 1e-30), 1.0
    )

    loss_sum = pos_weight * jnp.sum(wneg_p) + jnp.sum(wpos_p)
    return loss_sum / nf  # 'mean' reduction


def _reference(logits, target):
    x = logits.astype(jnp.float32).reshape(-1)
    y = target.astype(jnp.float32).reshape(-1)
    cp = jnp.sum(y)
    cn = jnp.sum(1.0 - y)
    beta = cn / (cn + cp)
    pw = jnp.where(cp > 0.0, beta / jnp.maximum(1.0 - beta, 1e-30), 1.0)
    l = jnp.log1p(jnp.exp(-jnp.abs(x)))
    per = pw * y * (jnp.maximum(-x, 0.0) + l) + (1.0 - y) * (jnp.maximum(x, 0.0) + l)
    return jnp.mean(per)


if __name__ == "__main__":
    key = jax.random.PRNGKey(0)
    k1, k2, k3, k4, k5, k6 = jax.random.split(key, 6)

    # NCHW logits and binary target, as the PyTorch module would receive.
    x = jax.random.normal(k1, (2, 4, 16, 16), jnp.float32)
    t = (jax.random.uniform(k2, (2, 4, 16, 16)) > 0.7).astype(jnp.float32)

    loss = jax.block_until_ready(balanced_ce(x, t))
    ref = _reference(x, t)
    assert jnp.allclose(loss, ref, rtol=1e-4, atol=1e-5), (loss, ref)

    # all-zero target exercises the plain-BCE (pos_weight = 1) branch
    t0 = jnp.zeros_like(t)
    loss0 = jax.block_until_ready(balanced_ce(x, t0))
    ref0 = _reference(x, t0)
    assert jnp.allclose(loss0, ref0, rtol=1e-4, atol=1e-5), (loss0, ref0)

    # ragged element count (not a multiple of 128) exercises the padded-tail path
    xr = jax.random.normal(k3, (2, 3, 15, 17), jnp.float32)
    tr = (jax.random.uniform(k4, (2, 3, 15, 17)) > 0.5).astype(jnp.float32)
    lossr = jax.block_until_ready(balanced_ce(xr, tr))
    refr = _reference(xr, tr)
    assert jnp.allclose(lossr, refr, rtol=1e-4, atol=1e-5), (lossr, refr)

    # larger bf16 input exercises the 2-way "parallel" split (both v7x cores)
    xl = jax.random.normal(k5, (2, 8, 128, 128), jnp.bfloat16)
    tl = (jax.random.uniform(k6, (2, 8, 128, 128)) > 0.9).astype(jnp.float32)
    lossl = jax.block_until_ready(balanced_ce(xl, tl))
    refl = _reference(xl, tl)
    assert jnp.allclose(lossl, refl, rtol=2e-3, atol=1e-4), (lossl, refl)

    print("KERNEL_OK")
</pallas_src>

<mosaic_0001>
module attributes {stable_mosaic.version = 11 : i64} {
  func.func @_balanced_ce_kernel(%arg0: i32, %arg1: i32, %arg2: memref<16x128xf32, #tpu.memory_space<vmem>>, %arg3: memref<16x128xf32, #tpu.memory_space<vmem>>, %arg4: memref<1x16x128xf32, #tpu.memory_space<vmem>>, %arg5: memref<1x16x128xf32, #tpu.memory_space<vmem>>, %arg6: memref<1x16x128xf32, #tpu.memory_space<vmem>>) attributes {dimension_semantics = [#tpu.dimension_semantics<parallel>, #tpu.dimension_semantics<arbitrary>], iteration_bounds = array<i64: 1, 1>, scalar_prefetch = 0 : i64, scratch_operands = 0 : i64, tpu.core_type = #tpu.core_type<tc>, window_params = [{transform_indices = @transform_0, window_bounds = array<i64: 16, 128>}, {transform_indices = @transform_1, window_bounds = array<i64: 16, 128>}, {transform_indices = @transform_2, window_bounds = array<i64: 1, 16, 128>}, {transform_indices = @transform_3, window_bounds = array<i64: 1, 16, 128>}, {transform_indices = @transform_4, window_bounds = array<i64: 1, 16, 128>}]} {
    %c0 = arith.constant 0 : index
    %c0_0 = arith.constant 0 : index
    %0 = vector.load %arg2[%c0, %c0_0] : memref<16x128xf32, #tpu.memory_space<vmem>>, vector<16x128xf32>
    %c0_1 = arith.constant 0 : index
    %c0_2 = arith.constant 0 : index
    %1 = vector.load %arg3[%c0_1, %c0_2] : memref<16x128xf32, #tpu.memory_space<vmem>>, vector<16x128xf32>
    %2 = math.absf %0 : vector<16x128xf32>
    %cst = arith.constant 0.000000e+00 : f32
    %3 = vector.broadcast %cst : f32 to vector<16x128xf32>
    %4 = arith.subf %3, %2 : vector<16x128xf32>
    %5 = math.exp %4 : vector<16x128xf32>
    %6 = math.log1p %5 : vector<16x128xf32>
    %cst_3 = arith.constant 0.000000e+00 : f32
    %7 = vector.broadcast %cst_3 : f32 to vector<16x128xf32>
    %8 = arith.subf %7, %0 : vector<16x128xf32>
    %cst_4 = arith.constant 0.000000e+00 : f32
    %9 = vector.broadcast %cst_4 : f32 to vector<16x128xf32>
    %10 = arith.maximumf %8, %9 : vector<16x128xf32>
    %11 = arith.addf %10, %6 : vector<16x128xf32>
    %12 = arith.addf %11, %0 : vector<16x128xf32>
    %13 = arith.mulf %1, %11 : vector<16x128xf32>
    %cst_5 = arith.constant 1.000000e+00 : f32
    %14 = vector.broadcast %cst_5 : f32 to vector<16x128xf32>
    %15 = arith.subf %14, %1 : vector<16x128xf32>
    %16 = arith.mulf %15, %12 : vector<16x128xf32>
    %c0_i32 = arith.constant 0 : i32
    %17 = arith.cmpi eq, %arg1, %c0_i32 : i32
    %18 = arith.extui %17 : i1 to i32
    %c0_i32_6 = arith.constant 0 : i32
    %19 = arith.cmpi ne, %18, %c0_i32_6 : i32
    scf.if %19 {
      %c0_9 = arith.constant 0 : index
      %c0_10 = arith.constant 0 : index
      %c0_11 = arith.constant 0 : index
      %23 = vector.load %arg4[%c0_9, %c0_10, %c0_11] : memref<1x16x128xf32, #tpu.memory_space<vmem>>, vector<1x16x128xf32>
      %24 = vector.shape_cast %23 : vector<1x16x128xf32> to vector<16x128xf32>
      %25 = vector.shape_cast %1 : vector<16x128xf32> to vector<1x16x128xf32>
      tpu.vector_store %arg4[%c0_9, %c0_10, %c0_11], %25 {strides = array<i32>} : memref<1x16x128xf32, #tpu.memory_space<vmem>>, vector<1x16x128xf32>,
      %c0_12 = arith.constant 0 : index
      %c0_13 = arith.constant 0 : index
      %c0_14 = arith.constant 0 : index
      %26 = vector.load %arg5[%c0_12, %c0_13, %c0_14] : memref<1x16x128xf32, #tpu.memory_space<vmem>>, vector<1x16x128xf32>
      %27 = vector.shape_cast %26 : vector<1x16x128xf32> to vector<16x128xf32>
      %28 = vector.shape_cast %13 : vector<16x128xf32> to vector<1x16x128xf32>
      tpu.vector_store %arg5[%c0_12, %c0_13, %c0_14], %28 {strides = array<i32>} : memref<1x16x128xf32, #tpu.memory_space<vmem>>, vector<1x16x128xf32>,
      %c0_15 = arith.constant 0 : index
      %c0_16 = arith.constant 0 : index
      %c0_17 = arith.constant 0 : index
      %29 = vector.load %arg6[%c0_15, %c0_16, %c0_17] : memref<1x16x128xf32, #tpu.memory_space<vmem>>, vector<1x16x128xf32>
      %30 = vector.shape_cast %29 : vector<1x16x128xf32> to vector<16x128xf32>
      %31 = vector.shape_cast %16 : vector<16x128xf32> to vector<1x16x128xf32>
      tpu.vector_store %arg6[%c0_15, %c0_16, %c0_17], %31 {strides = array<i32>} : memref<1x16x128xf32, #tpu.memory_space<vmem>>, vector<1x16x128xf32>,
    } else {
    }
    %c0_i32_7 = arith.constant 0 : i32
    %20 = arith.cmpi ne, %arg1, %c0_i32_7 : i32
    %21 = arith.extui %20 : i1 to i32
    %c0_i32_8 = arith.constant 0 : i32
    %22 = arith.cmpi ne, %21, %c0_i32_8 : i32
    scf.if %22 {
      %c0_9 = arith.constant 0 : index
      %c0_10 = arith.constant 0 : index
      %c0_11 = arith.constant 0 : index
      %23 = vector.load %arg4[%c0_9, %c0_10, %c0_11] : memref<1x16x128xf32, #tpu.memory_space<vmem>>, vector<1x16x128xf32>
      %24 = vector.shape_cast %23 : vector<1x16x128xf32> to vector<16x128xf32>
      %25 = arith.addf %24, %1 : vector<16x128xf32>
      %c0_12 = arith.constant 0 : index
      %c0_13 = arith.constant 0 : index
      %c0_14 = arith.constant 0 : index
      %26 = vector.load %arg4[%c0_12, %c0_13, %c0_14] : memref<1x16x128xf32, #tpu.memory_space<vmem>>, vector<1x16x128xf32>
      %27 = vector.shape_cast %26 : vector<1x16x128xf32> to vector<16x128xf32>
      %28 = vector.shape_cast %25 : vector<16x128xf32> to vector<1x16x128xf32>
      tpu.vector_store %arg4[%c0_12, %c0_13, %c0_14], %28 {strides = array<i32>} : memref<1x16x128xf32, #tpu.memory_space<vmem>>, vector<1x16x128xf32>,
      %c0_15 = arith.constant 0 : index
      %c0_16 = arith.constant 0 : index
      %c0_17 = arith.constant 0 : index
      %29 = vector.load %arg5[%c0_15, %c0_16, %c0_17] : memref<1x16x128xf32, #tpu.memory_space<vmem>>, vector<1x16x128xf32>
      %30 = vector.shape_cast %29 : vector<1x16x128xf32> to vector<16x128xf32>
      %31 = arith.addf %30, %13 : vector<16x128xf32>
      %c0_18 = arith.constant 0 : index
      %c0_19 = arith.constant 0 : index
      %c0_20 = arith.constant 0 : index
      %32 = vector.load %arg5[%c0_18, %c0_19, %c0_20] : memref<1x16x128xf32, #tpu.memory_space<vmem>>, vector<1x16x128xf32>
      %33 = vector.shape_cast %32 : vector<1x16x128xf32> to vector<16x128xf32>
      %34 = vector.shape_cast %31 : vector<16x128xf32> to vector<1x16x128xf32>
      tpu.vector_store %arg5[%c0_18, %c0_19, %c0_20], %34 {strides = array<i32>} : memref<1x16x128xf32, #tpu.memory_space<vmem>>, vector<1x16x128xf32>,
      %c0_21 = arith.constant 0 : index
      %c0_22 = arith.constant 0 : index
      %c0_23 = arith.constant 0 : index
      %35 = vector.load %arg6[%c0_21, %c0_22, %c0_23] : memref<1x16x128xf32, #tpu.memory_space<vmem>>, vector<1x16x128xf32>
      %36 = vector.shape_cast %35 : vector<1x16x128xf32> to vector<16x128xf32>
      %37 = arith.addf %36, %16 : vector<16x128xf32>
      %c0_24 = arith.constant 0 : index
      %c0_25 = arith.constant 0 : index
      %c0_26 = arith.constant 0 : index
      %38 = vector.load %arg6[%c0_24, %c0_25, %c0_26] : memref<1x16x128xf32, #tpu.memory_space<vmem>>, vector<1x16x128xf32>
      %39 = vector.shape_cast %38 : vector<1x16x128xf32> to vector<16x128xf32>
      %40 = vector.shape_cast %37 : vector<16x128xf32> to vector<1x16x128xf32>
      tpu.vector_store %arg6[%c0_24, %c0_25, %c0_26], %40 {strides = array<i32>} : memref<1x16x128xf32, #tpu.memory_space<vmem>>, vector<1x16x128xf32>,
    } else {
    }
    return
  }
  func.func @transform_0(%arg0: i32, %arg1: i32) -> (i32, i32) {
    %c1_i32 = arith.constant 1 : i32
    %0 = arith.muli %arg0, %c1_i32 : i32
    %1 = arith.addi %0, %arg1 : i32
    %c0_i32 = arith.constant 0 : i32
    %c0_i32_0 = arith.constant 0 : i32
    return %1, %c0_i32 : i32, i32
  }
  func.func @transform_1(%arg0: i32, %arg1: i32) -> (i32, i32) {
    %c1_i32 = arith.constant 1 : i32
    %0 = arith.muli %arg0, %c1_i32 : i32
    %1 = arith.addi %0, %arg1 : i32
    %c0_i32 = arith.constant 0 : i32
    %c0_i32_0 = arith.constant 0 : i32
    return %1, %c0_i32 : i32, i32
  }
  func.func @transform_2(%arg0: i32, %arg1: i32) -> (i32, i32, i32) {
    %c0_i32 = arith.constant 0 : i32
    %c0_i32_0 = arith.constant 0 : i32
    %c0_i32_1 = arith.constant 0 : i32
    return %arg0, %c0_i32, %c0_i32_0 : i32, i32, i32
  }
  func.func @transform_3(%arg0: i32, %arg1: i32) -> (i32, i32, i32) {
    %c0_i32 = arith.constant 0 : i32
    %c0_i32_0 = arith.constant 0 : i32
    %c0_i32_1 = arith.constant 0 : i32
    return %arg0, %c0_i32, %c0_i32_0 : i32, i32, i32
  }
  func.func @transform_4(%arg0: i32, %arg1: i32) -> (i32, i32, i32) {
    %c0_i32 = arith.constant 0 : i32
    %c0_i32_0 = arith.constant 0 : i32
    %c0_i32_1 = arith.constant 0 : i32
    return %arg0, %c0_i32, %c0_i32_0 : i32, i32, i32
  }
}

</mosaic_0001>

<llo_original>
// kernel: balanced_ce.1
$region0: #{balanced_ce.1}
  #allocation0 [shape = 'u32[]', space=smem, size = 0x4, offset = 0x4, fixed_abs, tag = 'smem constant byte address 0x4 - core index']
  #allocation1 [shape = 'u32[144,128]{1,0:T(1,128)}', space=vmem, size = 0x12000, scoped, tag = 'internal scratch']
  %s0 = inlined_call_operand.vmem [shape: f32[16,128], index: 0, kind: input, shape index: {}]
  %s1 = inlined_call_operand.vmem [shape: f32[16,128], index: 1, kind: input, shape index: {}]
  %s2 = inlined_call_operand.vmem [shape: f32[1,16,128], index: 2, kind: output, shape index: {0}]
  %s3 = inlined_call_operand.vmem [shape: f32[1,16,128], index: 3, kind: output, shape index: {1}]
  %s4 = inlined_call_operand.vmem [shape: f32[1,16,128], index: 4, kind: output, shape index: {2}]
  %5 = xla_tuple %s2, %s3, %s4
  %s6 = sld [smem:[#allocation0]]
  $region42: #{balanced_ce.1} parent=0
    _
  %s8 = ssub.s32 1, %s6
  %s9 = scalar_select 0, %s8, %s6
  // Predicated region
  $region2: #{balanced_ce.1} parent=0 // pred_check
    _
  $region3: #{balanced_ce.1} parent=0 // pred_check_branch
    %11 = sbr.rel (0) target = $region5
  $region4: #{balanced_ce.1} parent=0 // pred_region
    %s12 = sadd.s32 0, 0
    %s13 = smul.u32 2, %s12
    %p14 = scmp.lt.s32.totalorder %s13, 1
    %s15 = scalar_select %p14, %s13, 1
    %s16 = smul.addr %s15, 8
    %s17 = scalar_lea.vmem %s0, %s16
    %s18 = sadd.s32 0, 0
    %s19 = smul.u32 2, %s18
  $region5: #{balanced_ce.1} parent=0 // pred_fallthru
    _
  // Predicated region
  $region6: #{balanced_ce.1} parent=0 // pred_check
    _
  $region7: #{balanced_ce.1} parent=0 // pred_check_branch
    %21 = sbr.rel (0) target = $region9
  $region8: #{balanced_ce.1} parent=0 // pred_region
    %s22 = sadd.s32 0, 0
    %s23 = smul.u32 2, %s22
    %p24 = scmp.lt.s32.totalorder %s23, 1
    %s25 = scalar_select %p24, %s23, 1
    %s26 = smul.addr %s25, 8
    %s27 = scalar_lea.vmem %s1, %s26
    %s28 = sadd.s32 0, 0
    %s29 = smul.u32 2, %s28
  $region9: #{balanced_ce.1} parent=0 // pred_fallthru
    _
  %s30 = sadd.s32 0, 0
  %s31 = smul.u32 2, %s30
  %p32 = scmp.lt.s32.totalorder %s31, 1
  %s33 = scalar_select %p32, %s31, 1
  %s34 = smul.addr %s33, 8
  %s35 = scalar_lea.vmem %s0, %s34
  %s36 = sadd.s32 0, 0
  %s37 = smul.u32 2, %s36
  %p38 = scmp.lt.s32.totalorder %s37, 1
  %s39 = scalar_select %p38, %s37, 1
  %s40 = smul.addr %s39, 8
  %s41 = scalar_lea.vmem %s1, %s40
  %s42 = sadd.s32 0, 0
  %s43 = smul.u32 2, %s42
  %p44 = scmp.lt.s32.totalorder %s43, 1
  %s45 = scalar_select %p44, %s43, 1
  %s46 = smul.addr %s45, 8
  %s47 = scalar_lea.vmem %s0, %s46
  %s48 = sadd.s32 0, 0
  %s49 = smul.u32 2, %s48
  %s50 = sadd.s32 0, 0
  %s51 = smul.u32 2, %s50
  %p52 = scmp.lt.s32.totalorder %s51, 1
  %s53 = scalar_select %p52, %s51, 1
  %s54 = smul.addr %s53, 8
  %s55 = scalar_lea.vmem %s1, %s54
  %s56 = sadd.s32 0, 0
  %s57 = smul.u32 2, %s56
  %v58 = vld [vmem:[%s47] sm:$0xff]
  %v59 = vld [vmem:[%s47 + $0x8] sm:$0xff]
  %v60 = vld [vmem:[%s55] sm:$0xff]
  %v61 = vld [vmem:[%s55 + $0x8] sm:$0xff]
  %v62 = vand.u32 2147483647, %v58
  %v63 = vand.u32 2147483647, %v59
  %v64 = vsub.f32 0.0, %v62
  %v65 = vsub.f32 0.0, %v63
  %v66 = vmul.f32 %v64, 1.442695
  %v67 = vpow.pop %v66
  %v68 = vmul.f32 %v65, 1.442695
  %v69 = vpow.pop %v68
  %v70 = vadd.f32 %v67, 1.0
  %v71 = vlog2.pop %v70
  %v72 = vmul.f32 %v71, 0.6931472
  %v73 = vmul.f32 -0.5, %v67
  %v74 = vadd.f32 %v73, 1.0
  %v75 = vmul.f32 %v74, %v67
  %v76 = vand.u32 2147483647, %v67
  %vm77 = vcmp.lt.f32.partialorder %v76, 0.0004427343
  %v78 = vsel %vm77, %v75, %v72
  %v79 = vadd.f32 %v69, 1.0
  %v80 = vlog2.pop %v79
  %v81 = vmul.f32 %v80, 0.6931472
  %v82 = vmul.f32 -0.5, %v69
  %v83 = vadd.f32 %v82, 1.0
  %v84 = vmul.f32 %v83, %v69
  %v85 = vand.u32 2147483647, %v69
  %vm86 = vcmp.lt.f32.partialorder %v85, 0.0004427343
  %v87 = vsel %vm86, %v84, %v81
  %v88 = vsub.f32 0.0, %v58
  %v89 = vsub.f32 0.0, %v59
  %v90 = vmax.f32 %v88, 0.0
  %v91 = vmax.f32 %v89, 0.0
  %v92 = vadd.f32 %v90, %v78
  %v93 = vadd.f32 %v91, %v87
  %v94 = vadd.f32 %v92, %v58
  %v95 = vadd.f32 %v93, %v59
  %v96 = vmul.f32 %v60, %v92
  %v97 = vmul.f32 %v61, %v93
  %v98 = vsub.f32 1.0, %v60
  %v99 = vsub.f32 1.0, %v61
  %v100 = vmul.f32 %v98, %v94
  %v101 = vmul.f32 %v99, %v95
  %p102 = scmp.eq.s32.totalorder 0, 0
  // Predicated region
  $region10: #{balanced_ce.1} parent=0 // pred_check
    %p103 = pneg %p102
  $region11: #{balanced_ce.1} parent=0 // pred_check_branch
    %105 = sbr.rel (%p103) target = $region13
  $region12: #{balanced_ce.1} parent=0 // pred_region
    %106 = vst [vmem:[%s2] sm:$0xff] %v60
    %107 = vst [vmem:[%s2 + $0x8] sm:$0xff] %v61
    %108 = vst [vmem:[%s3] sm:$0xff] %v96
    %109 = vst [vmem:[%s3 + $0x8] sm:$0xff] %v97
    %110 = vst [vmem:[%s4] sm:$0xff] %v100
    %111 = vst [vmem:[%s4 + $0x8] sm:$0xff] %v101
  $region13: #{balanced_ce.1} parent=0 // pred_fallthru
    _
  %p112 = scmp.ne.s32.totalorder 0, 0
  // Predicated region
  $region14: #{balanced_ce.1} parent=0 // pred_check
    %p113 = pneg %p112
  $region15: #{balanced_ce.1} parent=0 // pred_check_branch
    %115 = sbr.rel (%p113) target = $region17
  $region16: #{balanced_ce.1} parent=0 // pred_region
    %v116 = vld [vmem:[%s2] sm:$0xff]
    %v117 = vld [vmem:[%s2 + $0x8] sm:$0xff]
    %v118 = vadd.f32 %v116, %v60
    %v119 = vadd.f32 %v117, %v61
    %120 = vst [vmem:[%s2] sm:$0xff] %v118
    %121 = vst [vmem:[%s2 + $0x8] sm:$0xff] %v119
    %v122 = vld [vmem:[%s3] sm:$0xff]
    %v123 = vld [vmem:[%s3 + $0x8] sm:$0xff]
    %v124 = vadd.f32 %v122, %v96
    %v125 = vadd.f32 %v123, %v97
    %126 = vst [vmem:[%s3] sm:$0xff] %v124
    %127 = vst [vmem:[%s3 + $0x8] sm:$0xff] %v125
    %v128 = vld [vmem:[%s4] sm:$0xff]
    %v129 = vld [vmem:[%s4 + $0x8] sm:$0xff]
    %v130 = vadd.f32 %v128, %v100
    %v131 = vadd.f32 %v129, %v101
    %132 = vst [vmem:[%s4] sm:$0xff] %v130
    %133 = vst [vmem:[%s4 + $0x8] sm:$0xff] %v131
  $region17: #{balanced_ce.1} parent=0 // pred_fallthru
    _
  // Predicated region
  $region18: #{balanced_ce.1} parent=0 // pred_check
    _
  $region19: #{balanced_ce.1} parent=0 // pred_check_branch
    %135 = sbr.rel (0) target = $region21
  $region20: #{balanced_ce.1} parent=0 // pred_region
    _
  $region21: #{balanced_ce.1} parent=0 // pred_fallthru
    _
  // Predicated region
  $region22: #{balanced_ce.1} parent=0 // pred_check
    _
  $region23: #{balanced_ce.1} parent=0 // pred_check_branch
    %137 = sbr.rel (0) target = $region25
  $region24: #{balanced_ce.1} parent=0 // pred_region
    _
  $region25: #{balanced_ce.1} parent=0 // pred_fallthru
    _
  // Predicated region
  $region26: #{balanced_ce.1} parent=0 // pred_check
    _
  $region27: #{balanced_ce.1} parent=0 // pred_check_branch
    %139 = sbr.rel (0) target = $region29
  $region28: #{balanced_ce.1} parent=0 // pred_region
    _
  $region29: #{balanced_ce.1} parent=0 // pred_fallthru
    _
  // Predicated region
  $region30: #{balanced_ce.1} parent=0 // pred_check
    _
  $region31: #{balanced_ce.1} parent=0 // pred_check_branch
    %141 = sbr.rel (0) target = $region33
  $region32: #{balanced_ce.1} parent=0 // pred_region
    _
  $region33: #{balanced_ce.1} parent=0 // pred_fallthru
    _
  // Predicated region
  $region34: #{balanced_ce.1} parent=0 // pred_check
    _
  $region35: #{balanced_ce.1} parent=0 // pred_check_branch
    %143 = sbr.rel (0) target = $region37
  $region36: #{balanced_ce.1} parent=0 // pred_region
    _
  $region37: #{balanced_ce.1} parent=0 // pred_fallthru
    _
  // Predicated region
  $region38: #{balanced_ce.1} parent=0 // pred_check
    _
  $region39: #{balanced_ce.1} parent=0 // pred_check_branch
    %145 = sbr.rel (0) target = $region41
  $region40: #{balanced_ce.1} parent=0 // pred_region
    _
  $region41: #{balanced_ce.1} parent=0 // pred_fallthru
    _

</llo_original>
